<compile_context>
chip_gen: v5e
topology: v5e:2x2
jax: 0.10.0
libtpu: 0.0.40
codegen_flags: <defaults>
</compile_context>

<pallas_src>
import functools
import math

import jax
import jax.numpy as jnp
from jax.experimental import pallas as pl
from jax.experimental.pallas import tpu as pltpu


def _round_up(x, m):
    return (x + m - 1) // m * m


def _decoder_kernel(*refs, n_linear):
    """refs = (x_ref, w0_ref, b0_ref, w1_ref, b1_ref, ..., o_ref).

    Transposed, lane-dense layout:
      x_ref:  [in_features, tn]   (rows on the 128-wide lane axis)
      w_ref:  [out, in]           (PyTorch nn.Linear layout)
      b_ref:  [out, 1]
      o_ref:  [out_dim, tn]
    """
    x_ref = refs[0]
    o_ref = refs[-1]
    param_refs = refs[1:-1]

    h = x_ref[...].astype(jnp.float32)                        # [in, tn]
    for li in range(n_linear):
        w = param_refs[2 * li][...].astype(jnp.float32)       # [out, in]
        b = param_refs[2 * li + 1][...].astype(jnp.float32)   # [out, 1]
        # MXU matmul; result lane axis = tn (lane-dense), f32 accumulation.
        h = jnp.dot(w, h, preferred_element_type=jnp.float32) + b
        if li != n_linear - 1:    # ReLU between linears, none after the last
            h = jnp.maximum(h, 0.0)
    o_ref[...] = h.astype(o_ref.dtype)


def decoder_forward(x, params, *, n_tile=2048, hbm_dtype=None):
    """Apply the Decoder MLP to the last dim of x.

    x:      [..., latent_dim]
    params: list of (W [out, in], b [out]) pairs (PyTorch nn.Linear layout).
    n_tile: rows processed per grid step (rounded to a multiple of 128).
    hbm_dtype: optionally cast HBM-facing tensors (x, params) to e.g. bf16;
               accumulation stays f32 and the output keeps x.dtype.
    """
    orig_shape = x.shape
    latent_dim = orig_shape[-1]
    out_dim = params[-1][0].shape[0]
    out_dtype = x.dtype

    # ---- layout plumbing in the wrapper (kernel is lane-dense) ----
    x2d = x.reshape(-1, latent_dim)
    n_rows = x2d.shape[0]

    min_pad = _round_up(n_rows, 128)
    tn = min(_round_up(max(n_tile, 128), 128), min_pad)
    # v7x has 2 TensorCores: keep >= 2 parallel grid steps when rows allow it.
    if min_pad >= 256 and tn >= min_pad:
        tn = _round_up(min_pad // 2, 128)
    n_pad = _round_up(n_rows, tn)
    grid = n_pad // tn

    if n_pad != n_rows:
        x2d = jnp.pad(x2d, ((0, n_pad - n_rows), (0, 0)))
    xt = x2d.T                                    # [latent_dim, n_pad]

    flat_params = []
    for (w, b) in params:
        flat_params.extend([w, b.reshape(-1, 1)])

    if hbm_dtype is not None:                     # optional bf16 HBM traffic
        xt = xt.astype(hbm_dtype)
        flat_params = [p.astype(hbm_dtype) for p in flat_params]

    n_linear = len(params)

    # x / out tiled over the (lane) row axis; weights & biases fully resident.
    in_specs = [pl.BlockSpec((latent_dim, tn), lambda i: (0, i))]
    for p in flat_params:
        in_specs.append(pl.BlockSpec(p.shape, lambda i: (0, 0)))
    out_spec = pl.BlockSpec((out_dim, tn), lambda i: (0, i))

    flops = 2 * n_pad * sum(int(w.shape[0]) * int(w.shape[1]) for (w, _) in params)
    bytes_accessed = (
        int(xt.size) * xt.dtype.itemsize
        + n_pad * out_dim * jnp.dtype(out_dtype).itemsize
        + sum(int(p.size) * p.dtype.itemsize for p in flat_params)
    )

    kernel = functools.partial(_decoder_kernel, n_linear=n_linear)

    out_t = pl.pallas_call(
        kernel,
        out_shape=jax.ShapeDtypeStruct((out_dim, n_pad), out_dtype),
        grid_spec=pltpu.PrefetchScalarGridSpec(
            num_scalar_prefetch=0,
            grid=(grid,),
            in_specs=in_specs,
            out_specs=out_spec,
        ),
        compiler_params=pltpu.CompilerParams(
            dimension_semantics=("parallel",)),
        cost_estimate=pl.CostEstimate(
            flops=flops, transcendentals=0, bytes_accessed=bytes_accessed),
    )(xt, *flat_params)

    out2d = out_t.T[:n_rows]                      # back to [N, out_dim]
    return out2d.reshape(*orig_shape[:-1], out_dim)


def init_decoder_params(key, latent_dim, input_dim, n_layers=0, n_units=32):
    """Deterministic init matching the create_net layer structure.

    Weights are stored in PyTorch nn.Linear layout: W [out, in], b [out].
    """
    dims = [latent_dim] + [n_units] * (n_layers + 1) + [input_dim]
    params = []
    for i in range(len(dims) - 1):
        key, kw, kb = jax.random.split(key, 3)
        fan_in = dims[i]
        bound = 1.0 / math.sqrt(fan_in)  # PyTorch nn.Linear-style uniform bound
        w = jax.random.uniform(kw, (dims[i + 1], dims[i]), jnp.float32,
                               minval=-bound, maxval=bound)
        b = jax.random.uniform(kb, (dims[i + 1],), jnp.float32,
                               minval=-bound, maxval=bound)
        params.append((w, b))
    return params


if __name__ == "__main__":
    # Small, module-consistent shapes: batch=2, seq=8, latent_dim=16 -> input_dim=8
    latent_dim, input_dim, n_layers, n_units = 16, 8, 0, 32
    key = jax.random.PRNGKey(0)
    key, kx = jax.random.split(key)
    data = jax.random.normal(kx, (2, 8, latent_dim), jnp.float32)

    params = init_decoder_params(key, latent_dim, input_dim,
                                 n_layers=n_layers, n_units=n_units)

    out = decoder_forward(data, params)
    out = jax.block_until_ready(out)

    # Pure-JAX reference check of the same MLP (PyTorch Linear: x @ W^T + b).
    h = data.reshape(-1, latent_dim)
    for li, (w, b) in enumerate(params):
        h = jnp.dot(h, w.T, precision=jax.lax.Precision.HIGHEST) + b
        if li != len(params) - 1:
            h = jnp.maximum(h, 0.0)
    ref = h.reshape(2, 8, input_dim)

    assert out.shape == (2, 8, input_dim)
    assert jnp.allclose(out, ref, atol=1e-4, rtol=1e-4)

    print("KERNEL_OK")
</pallas_src>

<mosaic_0001>
module attributes {stable_mosaic.version = 11 : i64} {
  func.func @_decoder_kernel(%arg0: i32, %arg1: memref<16x128xf32, #tpu.memory_space<vmem>>, %arg2: memref<32x16xf32, #tpu.memory_space<vmem>>, %arg3: memref<32x1xf32, #tpu.memory_space<vmem>>, %arg4: memref<8x32xf32, #tpu.memory_space<vmem>>, %arg5: memref<8x1xf32, #tpu.memory_space<vmem>>, %arg6: memref<8x128xf32, #tpu.memory_space<vmem>>) attributes {dimension_semantics = [#tpu.dimension_semantics<parallel>], iteration_bounds = array<i64: 1>, scalar_prefetch = 0 : i64, scratch_operands = 0 : i64, tpu.core_type = #tpu.core_type<tc>, window_params = [{transform_indices = @transform_0, window_bounds = array<i64: 16, 128>}, {pipeline_mode = #tpu.pipeline_mode<synchronous>, transform_indices = @transform_1, window_bounds = array<i64: 32, 16>}, {pipeline_mode = #tpu.pipeline_mode<synchronous>, transform_indices = @transform_2, window_bounds = array<i64: 32, 1>}, {pipeline_mode = #tpu.pipeline_mode<synchronous>, transform_indices = @transform_3, window_bounds = array<i64: 8, 32>}, {pipeline_mode = #tpu.pipeline_mode<synchronous>, transform_indices = @transform_4, window_bounds = array<i64: 8, 1>}, {transform_indices = @transform_5, window_bounds = array<i64: 8, 128>}]} {
    %c0 = arith.constant 0 : index
    %c0_0 = arith.constant 0 : index
    %0 = vector.load %arg1[%c0, %c0_0] : memref<16x128xf32, #tpu.memory_space<vmem>>, vector<16x128xf32>
    %c0_1 = arith.constant 0 : index
    %c0_2 = arith.constant 0 : index
    %1 = vector.load %arg2[%c0_1, %c0_2] : memref<32x16xf32, #tpu.memory_space<vmem>>, vector<32x16xf32>
    %c0_3 = arith.constant 0 : index
    %c0_4 = arith.constant 0 : index
    %2 = vector.load %arg3[%c0_3, %c0_4] : memref<32x1xf32, #tpu.memory_space<vmem>>, vector<32x1xf32>
    %cst = arith.constant dense<0.000000e+00> : vector<32x128xf32>
    %3 = tpu.matmul %1, %0, %cst {dimension_numbers = #tpu.dot_dimension_numbers<[1], [0], [0], [1], [0, 0, 1, 1], [], []>} : vector<32x16xf32>, vector<16x128xf32>, vector<32x128xf32> -> vector<32x128xf32>
    %4 = vector.broadcast %2 : vector<32x1xf32> to vector<32x128xf32>
    %5 = arith.addf %3, %4 : vector<32x128xf32>
    %cst_5 = arith.constant 0.000000e+00 : f32
    %6 = vector.broadcast %cst_5 : f32 to vector<32x128xf32>
    %7 = arith.maximumf %5, %6 : vector<32x128xf32>
    %c0_6 = arith.constant 0 : index
    %c0_7 = arith.constant 0 : index
    %8 = vector.load %arg4[%c0_6, %c0_7] : memref<8x32xf32, #tpu.memory_space<vmem>>, vector<8x32xf32>
    %c0_8 = arith.constant 0 : index
    %c0_9 = arith.constant 0 : index
    %9 = vector.load %arg5[%c0_8, %c0_9] : memref<8x1xf32, #tpu.memory_space<vmem>>, vector<8x1xf32>
    %cst_10 = arith.constant dense<0.000000e+00> : vector<8x128xf32>
    %10 = tpu.matmul %8, %7, %cst_10 {dimension_numbers = #tpu.dot_dimension_numbers<[1], [0], [0], [1], [0, 0, 1, 1], [], []>} : vector<8x32xf32>, vector<32x128xf32>, vector<8x128xf32> -> vector<8x128xf32>
    %11 = vector.broadcast %9 : vector<8x1xf32> to vector<8x128xf32>
    %12 = arith.addf %10, %11 : vector<8x128xf32>
    %c0_11 = arith.constant 0 : index
    %c0_12 = arith.constant 0 : index
    %13 = vector.load %arg6[%c0_11, %c0_12] : memref<8x128xf32, #tpu.memory_space<vmem>>, vector<8x128xf32>
    tpu.vector_store %arg6[%c0_11, %c0_12], %12 {strides = array<i32>} : memref<8x128xf32, #tpu.memory_space<vmem>>, vector<8x128xf32>,
    return
  }
  func.func @transform_0(%arg0: i32) -> (i32, i32) {
    %c0_i32 = arith.constant 0 : i32
    %c0_i32_0 = arith.constant 0 : i32
    return %c0_i32, %arg0 : i32, i32
  }
  func.func @transform_1(%arg0: i32) -> (i32, i32) {
    %c0_i32 = arith.constant 0 : i32
    %c0_i32_0 = arith.constant 0 : i32
    %c0_i32_1 = arith.constant 0 : i32
    return %c0_i32, %c0_i32_0 : i32, i32
  }
  func.func @transform_2(%arg0: i32) -> (i32, i32) {
    %c0_i32 = arith.constant 0 : i32
    %c0_i32_0 = arith.constant 0 : i32
    %c0_i32_1 = arith.constant 0 : i32
    return %c0_i32, %c0_i32_0 : i32, i32
  }
  func.func @transform_3(%arg0: i32) -> (i32, i32) {
    %c0_i32 = arith.constant 0 : i32
    %c0_i32_0 = arith.constant 0 : i32
    %c0_i32_1 = arith.constant 0 : i32
    return %c0_i32, %c0_i32_0 : i32, i32
  }
  func.func @transform_4(%arg0: i32) -> (i32, i32) {
    %c0_i32 = arith.constant 0 : i32
    %c0_i32_0 = arith.constant 0 : i32
    %c0_i32_1 = arith.constant 0 : i32
    return %c0_i32, %c0_i32_0 : i32, i32
  }
  func.func @transform_5(%arg0: i32) -> (i32, i32) {
    %c0_i32 = arith.constant 0 : i32
    %c0_i32_0 = arith.constant 0 : i32
    return %c0_i32, %arg0 : i32, i32
  }
}

</mosaic_0001>

<llo_original>
// kernel: tpu_custom_call.1
$region0: #{tpu_custom_call.1}
  #allocation0 [shape = 'u32[]', space=smem, size = 0x4, offset = 0x4, fixed_abs, tag = 'smem constant byte address 0x4 - core index']
  #allocation1 [shape = 'u32[72,128]{1,0:T(1,128)}', space=vmem, size = 0x9000, scoped, tag = 'internal scratch']
  %s0 = inlined_call_operand.vmem [shape: f32[16,128], index: 0, kind: input, shape index: {}]
  %s1 = inlined_call_operand.vmem [shape: f32[32,16], index: 1, kind: input, shape index: {}]
  %s2 = inlined_call_operand.vmem [shape: f32[32,1], index: 2, kind: input, shape index: {}]
  %s3 = inlined_call_operand.vmem [shape: f32[8,32], index: 3, kind: input, shape index: {}]
  %s4 = inlined_call_operand.vmem [shape: f32[8,1], index: 4, kind: input, shape index: {}]
  %s5 = inlined_call_operand.hbm [shape: f32[8,128], index: 5, kind: output, shape index: {}]
  %s6 = sld [smem:[#allocation0]]
  $region30: #{tpu_custom_call.1} parent=0
    _
  %s8 = ssub.s32 1, %s6
  %s9 = scalar_select 0, %s8, %s6
  $region1: #{tpu_custom_call.1} parent=0
    #allocation2 [shape = 'u8[4096]{0}', space=vmem, size = 0x1000, scoped, tag = 'output window, operand 0, single buffered']
    #allocation3 [shape = 's32[1]{0}', space=sflag, size = 0x4, scoped, tag = 'scoped memory for tpu_custom_call.1']
    %10 = vsyncpa [#allocation3], 0
    // Predicated region
    $region2: #{tpu_custom_call.1} parent=1 // pred_check
      _
    $region3: #{tpu_custom_call.1} parent=1 // pred_check_branch
      %12 = sbr.rel (0) target = $region5
    $region4: #{tpu_custom_call.1} parent=1 // pred_region
      _
    $region5: #{tpu_custom_call.1} parent=1 // pred_fallthru
      _
    // Predicated region
    $region6: #{tpu_custom_call.1} parent=1 // pred_check
      _
    $region7: #{tpu_custom_call.1} parent=1 // pred_check_branch
      %14 = sbr.rel (0) target = $region9
    $region8: #{tpu_custom_call.1} parent=1 // pred_region
      _
    $region9: #{tpu_custom_call.1} parent=1 // pred_fallthru
      _
    // Predicated region
    $region10: #{tpu_custom_call.1} parent=1 // pred_check
      _
    $region11: #{tpu_custom_call.1} parent=1 // pred_check_branch
      %16 = sbr.rel (0) target = $region13
    $region12: #{tpu_custom_call.1} parent=1 // pred_region
      _
    $region13: #{tpu_custom_call.1} parent=1 // pred_fallthru
      _
    // Predicated region
    $region14: #{tpu_custom_call.1} parent=1 // pred_check
      _
    $region15: #{tpu_custom_call.1} parent=1 // pred_check_branch
      %18 = sbr.rel (0) target = $region17
    $region16: #{tpu_custom_call.1} parent=1 // pred_region
      _
    $region17: #{tpu_custom_call.1} parent=1 // pred_fallthru
      _
    // Predicated region
    $region18: #{tpu_custom_call.1} parent=1 // pred_check
      _
    $region19: #{tpu_custom_call.1} parent=1 // pred_check_branch
      %20 = sbr.rel (0) target = $region21
    $region20: #{tpu_custom_call.1} parent=1 // pred_region
      _
    $region21: #{tpu_custom_call.1} parent=1 // pred_fallthru
      _
    %v21 = vld [vmem:[%s0] sm:$0xff]
    %v22 = vld [vmem:[%s0 + $0x8] sm:$0xff]
    %v23 = vld [vmem:[%s1] sm:$0xff]
    %v24 = vld [vmem:[%s1 + $0x8] sm:$0xff]
    %v25 = vld [vmem:[%s1 + $0x10] sm:$0xff]
    %v26 = vld [vmem:[%s1 + $0x18] sm:$0xff]
    %v27 = vld [vmem:[%s2] sm:$0xff]
    %v28 = vld [vmem:[%s2 + $0x8] sm:$0xff]
    %v29 = vld [vmem:[%s2 + $0x10] sm:$0xff]
    %v30 = vld [vmem:[%s2 + $0x18] sm:$0xff]
    %32 = vset.pattern.permute.xlu0 0
    %33 = vperm.xlu0 %32, %v27
    %v34 = vpop.permute.xlu0 %33
    %37 = vset.pattern.permute.xlu0 0
    %38 = vperm.xlu0 %37, %v28
    %v39 = vpop.permute.xlu0 %38
    %42 = vset.pattern.permute.xlu0 0
    %43 = vperm.xlu0 %42, %v29
    %v44 = vpop.permute.xlu0 %43
    %47 = vset.pattern.permute.xlu0 0
    %48 = vperm.xlu0 %47, %v30
    %v49 = vpop.permute.xlu0 %48
    %vm51 = vcmask 130048
    %v53 = vsel %vm51, %v23, 0
    %v56 = vsel %vm51, %v24, 0
    %v59 = vsel %vm51, %v25, 0
    %v62 = vsel %vm51, %v26, 0
    %64 = vmatpush.msra.mxu0 0.0
    %65 = vmatpush.msra.mxu0 0.0
    %66 = vmatpush.msra.mxu0 0.0
    %67 = vmatpush.msra.mxu0 0.0
    %68 = vmatpush.msra.mxu0 0.0
    %69 = vmatpush.msra.mxu0 0.0
    %70 = vmatpush.msra.mxu0 0.0
    %71 = vmatpush.msra.mxu0 0.0
    %72 = vmatpush.msra.mxu0 0.0
    %73 = vmatpush.msra.mxu0 0.0
    %74 = vmatpush.msra.mxu0 0.0
    %75 = vmatpush.msra.mxu0 0.0
    %76 = vmatpush.msra.mxu0 0.0
    %77 = vmatpush.msra.mxu0 0.0
    %78 = vmatpush.msra.mxu0 %v22
    %79 = vmatpush.msra.mxu0 %v21
    %80 = vmatmul.f32.gmra.mxu0 %v53
    %v81 = vpop.f32.mrf.mxu0
    %v82 = vadd.f32 %v34, %v81
    %83 = vmatmul.f32.gmra.mxu0 %v56
    %v84 = vpop.f32.mrf.mxu0
    %v85 = vadd.f32 %v39, %v84
    %86 = vmatmul.f32.gmra.mxu0 %v59
    %v87 = vpop.f32.mrf.mxu0
    %v88 = vadd.f32 %v44, %v87
    %89 = vmatmul.f32.gmra.mxu0 %v62
    %v90 = vpop.f32.mrf.mxu0
    %v91 = vadd.f32 %v49, %v90
    %92 = vdwg.mxu0
    %v93 = vmax.f32 %v82, 0.0
    %v94 = vmax.f32 %v85, 0.0
    %v95 = vmax.f32 %v88, 0.0
    %v96 = vmax.f32 %v91, 0.0
    %v97 = vld [vmem:[%s3] sm:$0xff]
    %v98 = vld [vmem:[%s4] sm:$0xff]
    %100 = vset.pattern.permute.xlu0 0
    %101 = vperm.xlu0 %100, %v98
    %v102 = vpop.permute.xlu0 %101
    %vm104 = vcmask 261120
    %v106 = vsel %vm104, %v97, 0
    %108 = vmatpush.msra.mxu0 0.0
    %109 = vmatpush.msra.mxu0 0.0
    %110 = vmatpush.msra.mxu0 0.0
    %111 = vmatpush.msra.mxu0 0.0
    %112 = vmatpush.msra.mxu0 0.0
    %113 = vmatpush.msra.mxu0 0.0
    %114 = vmatpush.msra.mxu0 0.0
    %115 = vmatpush.msra.mxu0 0.0
    %116 = vmatpush.msra.mxu0 0.0
    %117 = vmatpush.msra.mxu0 0.0
    %118 = vmatpush.msra.mxu0 0.0
    %119 = vmatpush.msra.mxu0 0.0
    %120 = vmatpush.msra.mxu0 %v96
    %121 = vmatpush.msra.mxu0 %v95
    %122 = vmatpush.msra.mxu0 %v94
    %123 = vmatpush.msra.mxu0 %v93
    %124 = vmatmul.f32.gmra.mxu0 %v106
    %v125 = vpop.f32.mrf.mxu0
    %v126 = vadd.f32 %v102, %v125
    %127 = vdwg.mxu0
    %128 = vst [vmem:[#allocation2] sm:$0xff] %v126
    // Predicated region
    $region22: #{tpu_custom_call.1} parent=1 // pred_check
      _
    $region23: #{tpu_custom_call.1} parent=1 // pred_check_branch
      %130 = sbr.rel (0) target = $region25
    $region24: #{tpu_custom_call.1} parent=1 // pred_region
      %132 = vsyncadd [#allocation3], 0
      %s134 = sshll.u32 [#allocation2], 4
      %s135 = int_to_ptr.vmem [resolvable:$true] %s134
      %s136 = sshll.u32 %s5, 4
      %s137 = int_to_ptr.hbm [resolvable:$true] %s136
      %139 = dma.vmem_to_hbm [thread:$0]  %s135, 128, %s137, [#allocation3]
    $region25: #{tpu_custom_call.1} parent=1 // pred_fallthru
      _
    // Predicated region
    $region26: #{tpu_custom_call.1} parent=1 // pred_check
      _
    $region27: #{tpu_custom_call.1} parent=1 // pred_check_branch
      %141 = sbr.rel (0) target = $region29
    $region28: #{tpu_custom_call.1} parent=1 // pred_region
      %143 = dma.done [#allocation3], 128
    $region29: #{tpu_custom_call.1} parent=1 // pred_fallthru
      _
    %144 = vsyncpa [#allocation3], 1

</llo_original>
